<compile_context>
chip_gen: v5e
topology: v5e:2x2
jax: 0.10.0
libtpu: 0.0.40
codegen_flags: <defaults>
</compile_context>

<pallas_src>
import functools

import jax
import jax.numpy as jnp
import numpy as np
from jax.experimental import pallas as pl
from jax.experimental.pallas import tpu as pltpu


def _round_up(x, m):
    return ((x + m - 1) // m) * m


def _tpu_vmem_capacity():
    try:
        info = pltpu.get_tpu_info()
        cap = getattr(info, "vmem_capacity_bytes", None)
        if cap:
            return int(cap)
    except Exception:
        pass
    return 64 * 1024 * 1024  # conservative (v7x-sized) fallback


def _choose_tb(B, L_pad, Dk, Dp, vmem_cap, in_bytes):
    """Pick a batch tile so the per-step footprint fits a generation-aware budget."""
    lane = lambda n: _round_up(n, 128)
    budget = min(vmem_cap // 4, 24 << 20)            # ~16-24 MiB per-step budget
    per_row = (2 * 2 * L_pad * lane(Dk) * in_bytes   # e_uv + e_r (double-buffered)
               + 2 * lane(L_pad) * 4                 # 2-D mask
               + 2 * Dp * in_bytes                   # uvproj
               + 2 * Dp * 4                          # output
               + 6 * L_pad * Dp * 4)                 # f32 intermediates (x, o, h, ...)
    fixed = 2 * ((2 * Dk + 3 * Dp) * Dp * in_bytes + 8 * Dp * 4)
    tb_cap = max((budget - fixed) // max(per_row, 1), 8)
    tb_cap = max((tb_cap // 8) * 8, 8)
    tb = min(_round_up(max(B, 1), 8), tb_cap, 512)
    # v7x-sized VMEM (<= 64 MiB) implies 2 TensorCores: keep grid >= 2 if possible.
    if vmem_cap <= (64 << 20) and _round_up(B, 8) >= 16:
        tb = min(tb, _round_up(_round_up(B, 8) // 2, 8))
    return max(tb, 8), per_row, fixed


# ----------------------------- Pallas kernel ------------------------------ #
def _uv_agg_kernel(e_uv_ref, e_r_ref, mask_ref, uvproj_ref, wslab_ref,
                   bslab_ref, out_ref, *, TB, L, Dk, Dp):
    TBL = TB * L
    wdt = wslab_ref.dtype

    # --- unpack the packed weight slab (row offsets are sublane-aligned) ---
    w1u = wslab_ref[0:Dk, :]                              # (Dk, Dp) w_r1, e_uv half
    w1r = wslab_ref[Dk:2 * Dk, :]                         # (Dk, Dp) w_r1, e_r half
    w2 = wslab_ref[2 * Dk:2 * Dk + Dp, :]                 # (Dp, Dp) w_r2
    wa1 = wslab_ref[2 * Dk + Dp:2 * Dk + 2 * Dp, :]       # (Dp, Dp) att1, o_hist half
    wa2 = wslab_ref[2 * Dk + 2 * Dp:2 * Dk + 3 * Dp, :]   # (Dp, Dp) att2

    bias = bslab_ref[...]                                 # (5, Dp) f32
    b1, b2, ba2 = bias[0:1, :], bias[1:2, :], bias[2:3, :]
    wa3 = bias[3:4, :]                                    # (1, Dp) att3 weight row
    ba3 = bias[4:5, 0:1]                                  # (1, 1)  att3 bias

    # --- x = relu(W_r1 @ cat(e_uv, e_r)) == relu(e_uv@W1u + e_r@W1r + b1) ---
    euv = e_uv_ref[...].reshape(TBL, Dk)
    er = e_r_ref[...].reshape(TBL, Dk)
    x = (jnp.dot(euv, w1u, preferred_element_type=jnp.float32)
         + jnp.dot(er, w1r, preferred_element_type=jnp.float32) + b1)
    x = jnp.maximum(x, 0.0)                               # (TBL, Dp)

    # --- o_history = relu(W_r2 @ x) ---
    o = jnp.dot(x.astype(wdt), w2, preferred_element_type=jnp.float32) + b2
    o = jnp.maximum(o, 0.0)                               # (TBL, Dp)

    # --- attention MLP; the uv_rep half of att1 (+ its bias) was precomputed
    #     host-side and arrives as uvproj (TB, Dp), broadcast over L here ---
    up = uvproj_ref[...]                                  # (TB, Dp)
    h = jnp.dot(o.astype(wdt), wa1, preferred_element_type=jnp.float32)
    h = jnp.maximum(h.reshape(TB, L, Dp)
                    + up.reshape(TB, 1, Dp).astype(jnp.float32), 0.0)
    h = jnp.dot(h.reshape(TBL, Dp).astype(wdt), wa2,
                preferred_element_type=jnp.float32) + ba2
    h = jnp.maximum(h, 0.0)                               # (TBL, Dp)

    # --- att3: width-1 projection -> VPU multiply + lane (XLU) reduce ---
    s = jnp.sum(h.reshape(TB, L, Dp) * wa3.reshape(1, 1, Dp), axis=-1) + ba3

    # --- masked softmax over the neighbor (L) axis, 2-D mask block ---
    m = mask_ref[...]                                     # (TB, L)
    s = jnp.where(m > 0.0, s, jnp.float32(-1e9))
    s = s - jnp.max(s, axis=1, keepdims=True)
    p = jnp.exp(s)
    inv = pl.reciprocal(jnp.sum(p, axis=1, keepdims=True), approx=False)
    att = p * inv                                         # (TB, L)

    # --- att_history = sum_L(o_history * att_w) -> lane-dense (TB, Dp) ---
    out_ref[...] = jnp.sum(o.reshape(TB, L, Dp) * att[:, :, None], axis=1)


# ------------------------------ Host wrapper ------------------------------ #
def uv_aggregator_forward(params, nodes, history_uv, history_uv_mask,
                          history_r, history_r_mask=None, uv=True, tb=None,
                          act_dtype=jnp.float32):
    del history_r_mask  # unused in the reference forward as well
    D = params["embed_dim"]
    mask = history_uv_mask.astype(jnp.float32)
    dim_mask = mask[:, :, None]

    # Embedding lookups + input masking (host-side glue; mask fuses with the
    # gather so no 3-D mask block is ever shipped to the kernel).
    if uv:
        e_uv = params["v2e"][history_uv] * dim_mask      # (B, L, D)
        uv_rep = params["u2e"][nodes]                    # (B, D)
    else:
        e_uv = params["u2e"][history_uv] * dim_mask
        uv_rep = params["v2e"][nodes]
    e_r = params["r2e"][history_r] * dim_mask            # (B, L, D)

    B, L, _ = e_uv.shape
    Dk = _round_up(D, 8)        # K (input) dim, sublane-aligned
    Dp = _round_up(D, 128)      # N (output/lane) dim, lane-dense
    in_bytes = jnp.dtype(act_dtype).itemsize

    def pad_cols(w, c):
        return jnp.pad(w, ((0, 0), (0, c - w.shape[1])))

    def pad_rc(w, r, c):
        return jnp.pad(w, ((0, r - w.shape[0]), (0, c - w.shape[1])))

    # Hoist the uv_rep half of the attention first layer (+ its bias) into one
    # dense XLA matmul outside the kernel; padded to Dp lane-dense columns.
    uvproj = uv_rep @ pad_cols(params["att1_w"][D:], Dp) \
        + pad_cols(params["att1_b"], Dp)                 # (B, Dp)

    # Pack the constant weights/biases into two slabs (fewer DMA descriptors),
    # zero-padding N (and K where the input is already Dp-wide) to Dp so every
    # intermediate stays lane-dense; padded columns are exactly 0 through relu.
    wslab = jnp.concatenate([
        pad_rc(params["w_r1_w"][:D], Dk, Dp),            # (Dk, Dp)
        pad_rc(params["w_r1_w"][D:], Dk, Dp),            # (Dk, Dp)
        pad_rc(params["w_r2_w"], Dp, Dp),                # (Dp, Dp)
        pad_rc(params["att1_w"][:D], Dp, Dp),            # (Dp, Dp) o_hist half
        pad_rc(params["att2_w"], Dp, Dp),                # (Dp, Dp)
    ], axis=0)                                           # (2Dk + 3Dp, Dp)
    bslab = jnp.concatenate([
        pad_cols(params["w_r1_b"], Dp),
        pad_cols(params["w_r2_b"], Dp),
        pad_cols(params["att2_b"], Dp),
        pad_cols(params["att3_w"].T, Dp),                # att3 weight as a row
        pad_cols(params["att3_b"].reshape(1, 1), Dp),
    ], axis=0).astype(jnp.float32)                       # (5, Dp)

    # Tile sizing (generation-aware) + explicit scoped-VMEM limit.
    L_pad = _round_up(L, 8)
    vmem_cap = _tpu_vmem_capacity()
    tb_auto, per_row, fixed = _choose_tb(B, L_pad, Dk, Dp, vmem_cap, in_bytes)
    tb = tb_auto if tb is None else max(_round_up(tb, 8), 8)
    B_pad = _round_up(B, tb)

    e_uv = jnp.pad(e_uv, ((0, B_pad - B), (0, L_pad - L), (0, Dk - D)))
    e_r = jnp.pad(e_r, ((0, B_pad - B), (0, L_pad - L), (0, Dk - D)))
    mask2 = jnp.pad(mask, ((0, B_pad - B), (0, L_pad - L)))
    uvproj = jnp.pad(uvproj, ((0, B_pad - B), (0, 0)))

    # Optional bf16 activation/weight stream (v6e/v7x); f32 by default so the
    # 1e-4 parity check below holds.  Biases / softmax stay f32 either way.
    e_uv = e_uv.astype(act_dtype)
    e_r = e_r.astype(act_dtype)
    uvproj = uvproj.astype(act_dtype)
    wslab = wslab.astype(act_dtype)

    footprint = fixed + tb * per_row
    vmem_limit = int(min(max(footprint * 5 // 4, 32 << 20), vmem_cap * 3 // 4))

    grid = (B_pad // tb,)
    kernel = functools.partial(_uv_agg_kernel, TB=tb, L=L_pad, Dk=Dk, Dp=Dp)

    flops = B_pad * L_pad * (4 * Dk * Dp + 6 * Dp * Dp + 12 * Dp)
    bytes_accessed = int((e_uv.size + e_r.size + uvproj.size + wslab.size)
                         * in_bytes
                         + (mask2.size + bslab.size + B_pad * Dp) * 4)
    cost = pl.CostEstimate(flops=int(flops),
                           transcendentals=int(B_pad * L_pad),
                           bytes_accessed=bytes_accessed)

    out = pl.pallas_call(
        kernel,
        out_shape=jax.ShapeDtypeStruct((B_pad, Dp), jnp.float32),
        grid_spec=pltpu.PrefetchScalarGridSpec(
            num_scalar_prefetch=0,
            grid=grid,
            in_specs=[
                pl.BlockSpec((tb, L_pad, Dk), lambda b: (b, 0, 0)),    # e_uv
                pl.BlockSpec((tb, L_pad, Dk), lambda b: (b, 0, 0)),    # e_r
                pl.BlockSpec((tb, L_pad), lambda b: (b, 0)),           # 2-D mask
                pl.BlockSpec((tb, Dp), lambda b: (b, 0)),              # uv proj
                pl.BlockSpec((2 * Dk + 3 * Dp, Dp), lambda b: (0, 0)), # weights
                pl.BlockSpec((5, Dp), lambda b: (0, 0)),               # biases
            ],
            out_specs=pl.BlockSpec((tb, Dp), lambda b: (b, 0)),
        ),
        compiler_params=pltpu.CompilerParams(
            dimension_semantics=("parallel",),
            vmem_limit_bytes=vmem_limit),
        cost_estimate=cost,
    )(e_uv, e_r, mask2, uvproj, wslab, bslab)

    # Padded batch rows / padded columns are garbage-free only after this slice.
    return out[:B, :D]                                    # (B, D)


# --------------------------- Pure-JAX reference ---------------------------- #
def reference_forward(params, nodes, history_uv, history_uv_mask, history_r,
                      uv=True):
    mask = history_uv_mask.astype(jnp.float32)
    dim_mask = mask[:, :, None]
    if uv:
        e_uv = params["v2e"][history_uv] * dim_mask
        uv_rep = params["u2e"][nodes]
    else:
        e_uv = params["u2e"][history_uv] * dim_mask
        uv_rep = params["v2e"][nodes]
    e_r = params["r2e"][history_r] * dim_mask
    x = jnp.concatenate([e_uv, e_r], -1)
    x = jax.nn.relu(x @ params["w_r1_w"] + params["w_r1_b"])
    o_hist = jax.nn.relu(x @ params["w_r2_w"] + params["w_r2_b"])
    uv_reps = jnp.broadcast_to(uv_rep[:, None, :], o_hist.shape)
    a = jnp.concatenate([o_hist, uv_reps], -1)
    a = jax.nn.relu(a @ params["att1_w"] + params["att1_b"])
    a = jax.nn.relu(a @ params["att2_w"] + params["att2_b"])
    s = (a @ params["att3_w"] + params["att3_b"])[..., 0]
    s = jnp.where(mask > 0, s, -1e9)
    att = jax.nn.softmax(s, axis=1)
    return jnp.sum(o_hist * att[..., None], axis=1)


# ------------------------------ Param init --------------------------------- #
def init_params(key, num_users, num_items, num_ratings, D):
    ks = jax.random.split(key, 8)

    def emb(k, n):
        return jax.random.normal(k, (n, D), jnp.float32) * 0.1

    def lin(k, din, dout):
        kw, kb = jax.random.split(k)
        lim = 1.0 / np.sqrt(din)
        w = jax.random.uniform(kw, (din, dout), jnp.float32, -lim, lim)
        b = jax.random.uniform(kb, (1, dout), jnp.float32, -lim, lim)
        return w, b

    p = {"embed_dim": D}
    p["u2e"] = emb(ks[0], num_users)
    p["v2e"] = emb(ks[1], num_items)
    p["r2e"] = emb(ks[2], num_ratings)
    p["w_r1_w"], p["w_r1_b"] = lin(ks[3], 2 * D, D)
    p["w_r2_w"], p["w_r2_b"] = lin(ks[4], D, D)
    p["att1_w"], p["att1_b"] = lin(ks[5], 2 * D, D)
    p["att2_w"], p["att2_b"] = lin(ks[6], D, D)
    p["att3_w"], p["att3_b"] = lin(ks[7], D, 1)
    return p


if __name__ == "__main__":
    B, L, D = 2, 8, 32
    num_users, num_items, num_ratings = 12, 10, 5

    params = init_params(jax.random.PRNGKey(0), num_users, num_items,
                         num_ratings, D)

    k1, k2, k3, k4 = jax.random.split(jax.random.PRNGKey(0), 4)
    nodes = jax.random.randint(k1, (B,), 0, num_users)
    history_uv = jax.random.randint(k2, (B, L), 0, num_items)
    history_r = jax.random.randint(k3, (B, L), 0, num_ratings)
    history_uv_mask = (jax.random.uniform(k4, (B, L)) > 0.3).astype(jnp.float32)
    history_uv_mask = history_uv_mask.at[:, 0].set(1.0)  # keep >=1 valid entry
    history_r_mask = history_uv_mask

    out = uv_aggregator_forward(params, nodes, history_uv, history_uv_mask,
                                history_r, history_r_mask, uv=True)
    out = jax.block_until_ready(out)

    ref = reference_forward(params, nodes, history_uv, history_uv_mask,
                            history_r, uv=True)
    assert out.shape == (B, D)
    assert np.allclose(np.asarray(out), np.asarray(ref), atol=1e-4, rtol=1e-4)
    print("KERNEL_OK")
</pallas_src>

<mosaic_0001>
module attributes {stable_mosaic.version = 11 : i64} {
  func.func @_uv_agg_kernel(%arg0: i32, %arg1: memref<8x8x32xf32, #tpu.memory_space<vmem>>, %arg2: memref<8x8x32xf32, #tpu.memory_space<vmem>>, %arg3: memref<8x8xf32, #tpu.memory_space<vmem>>, %arg4: memref<8x128xf32, #tpu.memory_space<vmem>>, %arg5: memref<448x128xf32, #tpu.memory_space<vmem>>, %arg6: memref<5x128xf32, #tpu.memory_space<vmem>>, %arg7: memref<8x128xf32, #tpu.memory_space<vmem>>) attributes {dimension_semantics = [#tpu.dimension_semantics<parallel>], iteration_bounds = array<i64: 1>, scalar_prefetch = 0 : i64, scratch_operands = 0 : i64, tpu.core_type = #tpu.core_type<tc>, window_params = [{transform_indices = @transform_0, window_bounds = array<i64: 8, 8, 32>}, {transform_indices = @transform_1, window_bounds = array<i64: 8, 8, 32>}, {transform_indices = @transform_2, window_bounds = array<i64: 8, 8>}, {transform_indices = @transform_3, window_bounds = array<i64: 8, 128>}, {pipeline_mode = #tpu.pipeline_mode<synchronous>, transform_indices = @transform_4, window_bounds = array<i64: 448, 128>}, {pipeline_mode = #tpu.pipeline_mode<synchronous>, transform_indices = @transform_5, window_bounds = array<i64: 5, 128>}, {transform_indices = @transform_6, window_bounds = array<i64: 8, 128>}]} {
    %c0 = arith.constant 0 : index
    %c0_0 = arith.constant 0 : index
    %0 = vector.load %arg5[%c0, %c0_0] : memref<448x128xf32, #tpu.memory_space<vmem>>, vector<32x128xf32>
    %c32 = arith.constant 32 : index
    %c0_1 = arith.constant 0 : index
    %1 = vector.load %arg5[%c32, %c0_1] : memref<448x128xf32, #tpu.memory_space<vmem>>, vector<32x128xf32>
    %c64 = arith.constant 64 : index
    %c0_2 = arith.constant 0 : index
    %2 = vector.load %arg5[%c64, %c0_2] : memref<448x128xf32, #tpu.memory_space<vmem>>, vector<128x128xf32>
    %c192 = arith.constant 192 : index
    %c0_3 = arith.constant 0 : index
    %3 = vector.load %arg5[%c192, %c0_3] : memref<448x128xf32, #tpu.memory_space<vmem>>, vector<128x128xf32>
    %c320 = arith.constant 320 : index
    %c0_4 = arith.constant 0 : index
    %4 = vector.load %arg5[%c320, %c0_4] : memref<448x128xf32, #tpu.memory_space<vmem>>, vector<128x128xf32>
    %c0_5 = arith.constant 0 : index
    %c0_6 = arith.constant 0 : index
    %5 = vector.load %arg6[%c0_5, %c0_6] : memref<5x128xf32, #tpu.memory_space<vmem>>, vector<5x128xf32>
    %6 = vector.extract_strided_slice %5 {offsets = [0, 0], sizes = [1, 128], strides = [1, 1]} : vector<5x128xf32> to vector<1x128xf32>
    %7 = vector.extract_strided_slice %5 {offsets = [1, 0], sizes = [1, 128], strides = [1, 1]} : vector<5x128xf32> to vector<1x128xf32>
    %8 = vector.extract_strided_slice %5 {offsets = [2, 0], sizes = [1, 128], strides = [1, 1]} : vector<5x128xf32> to vector<1x128xf32>
    %9 = vector.extract_strided_slice %5 {offsets = [3, 0], sizes = [1, 128], strides = [1, 1]} : vector<5x128xf32> to vector<1x128xf32>
    %10 = vector.extract_strided_slice %5 {offsets = [4, 0], sizes = [1, 1], strides = [1, 1]} : vector<5x128xf32> to vector<1x1xf32>
    %c0_7 = arith.constant 0 : index
    %c0_8 = arith.constant 0 : index
    %c0_9 = arith.constant 0 : index
    %11 = vector.load %arg1[%c0_7, %c0_8, %c0_9] : memref<8x8x32xf32, #tpu.memory_space<vmem>>, vector<8x8x32xf32>
    %12 = vector.shape_cast %11 : vector<8x8x32xf32> to vector<64x32xf32>
    %c0_10 = arith.constant 0 : index
    %c0_11 = arith.constant 0 : index
    %c0_12 = arith.constant 0 : index
    %13 = vector.load %arg2[%c0_10, %c0_11, %c0_12] : memref<8x8x32xf32, #tpu.memory_space<vmem>>, vector<8x8x32xf32>
    %14 = vector.shape_cast %13 : vector<8x8x32xf32> to vector<64x32xf32>
    %cst = arith.constant dense<0.000000e+00> : vector<64x128xf32>
    %15 = tpu.matmul %12, %0, %cst {dimension_numbers = #tpu.dot_dimension_numbers<[1], [0], [0], [1], [0, 0, 1, 1], [], []>} : vector<64x32xf32>, vector<32x128xf32>, vector<64x128xf32> -> vector<64x128xf32>
    %cst_13 = arith.constant dense<0.000000e+00> : vector<64x128xf32>
    %16 = tpu.matmul %14, %1, %cst_13 {dimension_numbers = #tpu.dot_dimension_numbers<[1], [0], [0], [1], [0, 0, 1, 1], [], []>} : vector<64x32xf32>, vector<32x128xf32>, vector<64x128xf32> -> vector<64x128xf32>
    %17 = arith.addf %15, %16 : vector<64x128xf32>
    %18 = vector.broadcast %6 : vector<1x128xf32> to vector<64x128xf32>
    %19 = arith.addf %17, %18 : vector<64x128xf32>
    %cst_14 = arith.constant 0.000000e+00 : f32
    %20 = vector.broadcast %cst_14 : f32 to vector<64x128xf32>
    %21 = arith.maximumf %19, %20 : vector<64x128xf32>
    %cst_15 = arith.constant dense<0.000000e+00> : vector<64x128xf32>
    %22 = tpu.matmul %21, %2, %cst_15 {dimension_numbers = #tpu.dot_dimension_numbers<[1], [0], [0], [1], [0, 0, 1, 1], [], []>} : vector<64x128xf32>, vector<128x128xf32>, vector<64x128xf32> -> vector<64x128xf32>
    %23 = vector.broadcast %7 : vector<1x128xf32> to vector<64x128xf32>
    %24 = arith.addf %22, %23 : vector<64x128xf32>
    %cst_16 = arith.constant 0.000000e+00 : f32
    %25 = vector.broadcast %cst_16 : f32 to vector<64x128xf32>
    %26 = arith.maximumf %24, %25 : vector<64x128xf32>
    %c0_17 = arith.constant 0 : index
    %c0_18 = arith.constant 0 : index
    %27 = vector.load %arg4[%c0_17, %c0_18] : memref<8x128xf32, #tpu.memory_space<vmem>>, vector<8x128xf32>
    %cst_19 = arith.constant dense<0.000000e+00> : vector<64x128xf32>
    %28 = tpu.matmul %26, %3, %cst_19 {dimension_numbers = #tpu.dot_dimension_numbers<[1], [0], [0], [1], [0, 0, 1, 1], [], []>} : vector<64x128xf32>, vector<128x128xf32>, vector<64x128xf32> -> vector<64x128xf32>
    %29 = vector.shape_cast %28 : vector<64x128xf32> to vector<8x8x128xf32>
    %30 = vector.shape_cast %27 : vector<8x128xf32> to vector<8x1x128xf32>
    %31 = vector.broadcast %30 : vector<8x1x128xf32> to vector<8x8x128xf32>
    %32 = arith.addf %29, %31 : vector<8x8x128xf32>
    %cst_20 = arith.constant 0.000000e+00 : f32
    %33 = vector.broadcast %cst_20 : f32 to vector<8x8x128xf32>
    %34 = arith.maximumf %32, %33 : vector<8x8x128xf32>
    %35 = vector.shape_cast %34 : vector<8x8x128xf32> to vector<64x128xf32>
    %cst_21 = arith.constant dense<0.000000e+00> : vector<64x128xf32>
    %36 = tpu.matmul %35, %4, %cst_21 {dimension_numbers = #tpu.dot_dimension_numbers<[1], [0], [0], [1], [0, 0, 1, 1], [], []>} : vector<64x128xf32>, vector<128x128xf32>, vector<64x128xf32> -> vector<64x128xf32>
    %37 = vector.broadcast %8 : vector<1x128xf32> to vector<64x128xf32>
    %38 = arith.addf %36, %37 : vector<64x128xf32>
    %cst_22 = arith.constant 0.000000e+00 : f32
    %39 = vector.broadcast %cst_22 : f32 to vector<64x128xf32>
    %40 = arith.maximumf %38, %39 : vector<64x128xf32>
    %41 = vector.shape_cast %40 : vector<64x128xf32> to vector<8x8x128xf32>
    %42 = vector.shape_cast %9 : vector<1x128xf32> to vector<1x1x128xf32>
    %43 = vector.broadcast %42 : vector<1x1x128xf32> to vector<8x8x128xf32>
    %44 = arith.mulf %41, %43 : vector<8x8x128xf32>
    %cst_23 = arith.constant dense<0.000000e+00> : vector<8x8xf32>
    %45 = vector.multi_reduction <add>, %44, %cst_23 [2] : vector<8x8x128xf32> to vector<8x8xf32>
    %46 = vector.broadcast %10 : vector<1x1xf32> to vector<8x8xf32>
    %47 = arith.addf %45, %46 : vector<8x8xf32>
    %c0_24 = arith.constant 0 : index
    %c0_25 = arith.constant 0 : index
    %48 = vector.load %arg3[%c0_24, %c0_25] : memref<8x8xf32, #tpu.memory_space<vmem>>, vector<8x8xf32>
    %cst_26 = arith.constant 0.000000e+00 : f32
    %49 = vector.broadcast %cst_26 : f32 to vector<8x8xf32>
    %50 = arith.cmpf ogt, %48, %49 : vector<8x8xf32>
    %cst_27 = arith.constant -1.000000e+09 : f32
    %51 = vector.broadcast %cst_27 : f32 to vector<8x8xf32>
    %52 = arith.select %50, %47, %51 : vector<8x8xi1>, vector<8x8xf32>
    %cst_28 = arith.constant dense<0xFF800000> : vector<8xf32>
    %53 = vector.multi_reduction <maximumf>, %52, %cst_28 [1] : vector<8x8xf32> to vector<8xf32>
    %54 = vector.shape_cast %53 : vector<8xf32> to vector<8x1xf32>
    %55 = vector.broadcast %54 : vector<8x1xf32> to vector<8x8xf32>
    %56 = arith.subf %52, %55 : vector<8x8xf32>
    %57 = math.exp %56 : vector<8x8xf32>
    %cst_29 = arith.constant dense<0.000000e+00> : vector<8xf32>
    %58 = vector.multi_reduction <add>, %57, %cst_29 [1] : vector<8x8xf32> to vector<8xf32>
    %59 = vector.shape_cast %58 : vector<8xf32> to vector<8x1xf32>
    %60 = tpu.reciprocal %59 : vector<8x1xf32> -> vector<8x1xf32>
    %61 = vector.broadcast %60 : vector<8x1xf32> to vector<8x8xf32>
    %62 = arith.mulf %57, %61 : vector<8x8xf32>
    %63 = vector.shape_cast %26 : vector<64x128xf32> to vector<8x8x128xf32>
    %64 = vector.shape_cast %62 : vector<8x8xf32> to vector<8x8x1xf32>
    %65 = vector.broadcast %64 : vector<8x8x1xf32> to vector<8x8x128xf32>
    %66 = arith.mulf %63, %65 : vector<8x8x128xf32>
    %cst_30 = arith.constant dense<0.000000e+00> : vector<8x128xf32>
    %67 = vector.multi_reduction <add>, %66, %cst_30 [1] : vector<8x8x128xf32> to vector<8x128xf32>
    %c0_31 = arith.constant 0 : index
    %c0_32 = arith.constant 0 : index
    %68 = vector.load %arg7[%c0_31, %c0_32] : memref<8x128xf32, #tpu.memory_space<vmem>>, vector<8x128xf32>
    tpu.vector_store %arg7[%c0_31, %c0_32], %67 {strides = array<i32>} : memref<8x128xf32, #tpu.memory_space<vmem>>, vector<8x128xf32>,
    return
  }
  func.func @transform_0(%arg0: i32) -> (i32, i32, i32) {
    %c0_i32 = arith.constant 0 : i32
    %c0_i32_0 = arith.constant 0 : i32
    %c0_i32_1 = arith.constant 0 : i32
    return %arg0, %c0_i32, %c0_i32_0 : i32, i32, i32
  }
  func.func @transform_1(%arg0: i32) -> (i32, i32, i32) {
    %c0_i32 = arith.constant 0 : i32
    %c0_i32_0 = arith.constant 0 : i32
    %c0_i32_1 = arith.constant 0 : i32
    return %arg0, %c0_i32, %c0_i32_0 : i32, i32, i32
  }
  func.func @transform_2(%arg0: i32) -> (i32, i32) {
    %c0_i32 = arith.constant 0 : i32
    %c0_i32_0 = arith.constant 0 : i32
    return %arg0, %c0_i32 : i32, i32
  }
  func.func @transform_3(%arg0: i32) -> (i32, i32) {
    %c0_i32 = arith.constant 0 : i32
    %c0_i32_0 = arith.constant 0 : i32
    return %arg0, %c0_i32 : i32, i32
  }
  func.func @transform_4(%arg0: i32) -> (i32, i32) {
    %c0_i32 = arith.constant 0 : i32
    %c0_i32_0 = arith.constant 0 : i32
    %c0_i32_1 = arith.constant 0 : i32
    return %c0_i32, %c0_i32_0 : i32, i32
  }
  func.func @transform_5(%arg0: i32) -> (i32, i32) {
    %c0_i32 = arith.constant 0 : i32
    %c0_i32_0 = arith.constant 0 : i32
    %c0_i32_1 = arith.constant 0 : i32
    return %c0_i32, %c0_i32_0 : i32, i32
  }
  func.func @transform_6(%arg0: i32) -> (i32, i32) {
    %c0_i32 = arith.constant 0 : i32
    %c0_i32_0 = arith.constant 0 : i32
    return %arg0, %c0_i32 : i32, i32
  }
}

</mosaic_0001>

<llo_original>
// kernel: tpu_custom_call.1
$region0: #{tpu_custom_call.1}
  #allocation0 [shape = 'u32[]', space=smem, size = 0x4, offset = 0x4, fixed_abs, tag = 'smem constant byte address 0x4 - core index']
  #allocation1 [shape = 'u32[72,128]{1,0:T(1,128)}', space=vmem, size = 0x9000, scoped, tag = 'internal scratch']
  %s0 = inlined_call_operand.hbm [shape: f32[8,8,32], index: 0, kind: input, shape index: {}]
  %s1 = inlined_call_operand.hbm [shape: f32[8,8,32], index: 1, kind: input, shape index: {}]
  %s2 = inlined_call_operand.hbm [shape: f32[8,8], index: 2, kind: input, shape index: {}]
  %s3 = inlined_call_operand.hbm [shape: f32[8,128], index: 3, kind: input, shape index: {}]
  %s4 = inlined_call_operand.hbm [shape: f32[448,128], index: 4, kind: input, shape index: {}]
  %s5 = inlined_call_operand.hbm [shape: f32[5,128], index: 5, kind: input, shape index: {}]
  %s6 = inlined_call_operand.hbm [shape: f32[8,128], index: 6, kind: output, shape index: {}]
  %s7 = sld [smem:[#allocation0]]
  $region58: #{tpu_custom_call.1} parent=0
    _
  %s9 = ssub.s32 1, %s7
  %s10 = scalar_select 0, %s9, %s7
  $region1: #{tpu_custom_call.1} parent=0
    #allocation2 [shape = 'u8[32768]{0}', space=vmem, size = 0x8000, scoped, tag = 'input window, operand 0, single buffered']
    #allocation3 [shape = 's32[1]{0}', space=sflag, size = 0x4, scoped, tag = 'scoped memory for tpu_custom_call.1']
    #allocation4 [shape = 's32[1]{0}', space=sflag, size = 0x4, scoped, tag = 'scoped memory for tpu_custom_call.1']
    #allocation5 [shape = 'u8[32768]{0}', space=vmem, size = 0x8000, scoped, tag = 'input window, operand 1, single buffered']
    #allocation6 [shape = 's32[1]{0}', space=sflag, size = 0x4, scoped, tag = 'scoped memory for tpu_custom_call.1']
    #allocation7 [shape = 'u8[4096]{0}', space=vmem, size = 0x1000, scoped, tag = 'input window, operand 2, single buffered']
    #allocation8 [shape = 'u8[4096]{0}', space=vmem, size = 0x1000, scoped, tag = 'input window, operand 3, single buffered']
    #allocation9 [shape = 's32[1]{0}', space=sflag, size = 0x4, scoped, tag = 'scoped memory for tpu_custom_call.1']
    #allocation10 [shape = 'u8[229376]{0}', space=vmem, size = 0x38000, scoped, tag = 'input window, operand 4, single buffered']
    #allocation11 [shape = 'u8[4096]{0}', space=vmem, size = 0x1000, scoped, tag = 'input window, operand 5, single buffered']
    #allocation12 [shape = 's32[1]{0}', space=sflag, size = 0x4, scoped, tag = 'scoped memory for tpu_custom_call.1']
    #allocation13 [shape = 'u8[4096]{0}', space=vmem, size = 0x1000, scoped, tag = 'output window, operand 0, single buffered']
    %11 = vsyncpa [#allocation3], 0
    %12 = vsyncpa [#allocation6], 0
    %13 = vsyncpa [#allocation9], 0
    %14 = vsyncpa [#allocation12], 0
    %15 = vsyncpa [#allocation4], 0
    // Predicated region
    $region2: #{tpu_custom_call.1} parent=1 // pred_check
      _
    $region3: #{tpu_custom_call.1} parent=1 // pred_check_branch
      %17 = sbr.rel (0) target = $region5
    $region4: #{tpu_custom_call.1} parent=1 // pred_region
      %19 = vsyncadd [#allocation3], 0
      %s20 = sshll.u32 %s0, 4
      %s21 = int_to_ptr.hbm [resolvable:$true] %s20
      %s22 = sshll.u32 [#allocation2], 4
      %s23 = int_to_ptr.vmem [resolvable:$true] %s22
      %28 = dma.hbm_to_vmem [thread:$0]  %s21, 1024, %s23, [#allocation3], 128, 128, 8
    $region5: #{tpu_custom_call.1} parent=1 // pred_fallthru
      _
    // Predicated region
    $region6: #{tpu_custom_call.1} parent=1 // pred_check
      _
    $region7: #{tpu_custom_call.1} parent=1 // pred_check_branch
      %30 = sbr.rel (0) target = $region9
    $region8: #{tpu_custom_call.1} parent=1 // pred_region
      %32 = vsyncadd [#allocation6], 0
      %s33 = sshll.u32 %s1, 4
      %s34 = int_to_ptr.hbm [resolvable:$true] %s33
      %s35 = sshll.u32 [#allocation5], 4
      %s36 = int_to_ptr.vmem [resolvable:$true] %s35
      %41 = dma.hbm_to_vmem [thread:$0]  %s34, 1024, %s36, [#allocation6], 128, 128, 8
    $region9: #{tpu_custom_call.1} parent=1 // pred_fallthru
      _
    // Predicated region
    $region10: #{tpu_custom_call.1} parent=1 // pred_check
      _
    $region11: #{tpu_custom_call.1} parent=1 // pred_check_branch
      %43 = sbr.rel (0) target = $region13
    $region12: #{tpu_custom_call.1} parent=1 // pred_region
      %45 = vsyncadd [#allocation6], 0
      %s47 = sshll.u32 %s2, 4
      %s48 = int_to_ptr.hbm [resolvable:$true] %s47
      %s49 = sshll.u32 [#allocation7], 4
      %s50 = int_to_ptr.vmem [resolvable:$true] %s49
      %52 = dma.hbm_to_vmem [thread:$0]  %s48, 128, %s50, [#allocation6]
    $region13: #{tpu_custom_call.1} parent=1 // pred_fallthru
      _
    // Predicated region
    $region14: #{tpu_custom_call.1} parent=1 // pred_check
      _
    $region15: #{tpu_custom_call.1} parent=1 // pred_check_branch
      %54 = sbr.rel (0) target = $region17
    $region16: #{tpu_custom_call.1} parent=1 // pred_region
      %56 = vsyncadd [#allocation9], 0
      %s58 = sshll.u32 %s3, 4
      %s59 = int_to_ptr.hbm [resolvable:$true] %s58
      %s60 = sshll.u32 [#allocation8], 4
      %s61 = int_to_ptr.vmem [resolvable:$true] %s60
      %63 = dma.hbm_to_vmem [thread:$0]  %s59, 128, %s61, [#allocation9]
    $region17: #{tpu_custom_call.1} parent=1 // pred_fallthru
      _
    // Predicated region
    $region18: #{tpu_custom_call.1} parent=1 // pred_check
      _
    $region19: #{tpu_custom_call.1} parent=1 // pred_check_branch
      %65 = sbr.rel (0) target = $region21
    $region20: #{tpu_custom_call.1} parent=1 // pred_region
      %67 = vsyncadd [#allocation9], 0
      %s68 = sshll.u32 %s4, 4
      %s69 = int_to_ptr.hbm [resolvable:$true] %s68
      %s70 = sshll.u32 [#allocation10], 4
      %s71 = int_to_ptr.vmem [resolvable:$true] %s70
      %76 = dma.hbm_to_vmem [thread:$0]  %s69, 7168, %s71, [#allocation9], 128, 128, 8
    $region21: #{tpu_custom_call.1} parent=1 // pred_fallthru
      _
    // Predicated region
    $region22: #{tpu_custom_call.1} parent=1 // pred_check
      _
    $region23: #{tpu_custom_call.1} parent=1 // pred_check_branch
      %78 = sbr.rel (0) target = $region25
    $region24: #{tpu_custom_call.1} parent=1 // pred_region
      %80 = vsyncadd [#allocation12], 0
      %s82 = sshll.u32 %s5, 4
      %s83 = int_to_ptr.hbm [resolvable:$true] %s82
      %s84 = sshll.u32 [#allocation11], 4
      %s85 = int_to_ptr.vmem [resolvable:$true] %s84
      %87 = dma.hbm_to_vmem [thread:$0]  %s83, 128, %s85, [#allocation12]
    $region25: #{tpu_custom_call.1} parent=1 // pred_fallthru
      _
    // Predicated region
    $region26: #{tpu_custom_call.1} parent=1 // pred_check
      _
    $region27: #{tpu_custom_call.1} parent=1 // pred_check_branch
      %89 = sbr.rel (0) target = $region29
    $region28: #{tpu_custom_call.1} parent=1 // pred_region
      %91 = dma.done [#allocation3], 1024
    $region29: #{tpu_custom_call.1} parent=1 // pred_fallthru
      _
    // Predicated region
    $region30: #{tpu_custom_call.1} parent=1 // pred_check
      _
    $region31: #{tpu_custom_call.1} parent=1 // pred_check_branch
      %93 = sbr.rel (0) target = $region33
    $region32: #{tpu_custom_call.1} parent=1 // pred_region
      %95 = dma.done [#allocation6], 1024
    $region33: #{tpu_custom_call.1} parent=1 // pred_fallthru
      _
    // Predicated region
    $region34: #{tpu_custom_call.1} parent=1 // pred_check
      _
    $region35: #{tpu_custom_call.1} parent=1 // pred_check_branch
      %97 = sbr.rel (0) target = $region37
    $region36: #{tpu_custom_call.1} parent=1 // pred_region
      %99 = dma.done [#allocation6], 128
    $region37: #{tpu_custom_call.1} parent=1 // pred_fallthru
      _
    // Predicated region
    $region38: #{tpu_custom_call.1} parent=1 // pred_check
      _
    $region39: #{tpu_custom_call.1} parent=1 // pred_check_branch
      %101 = sbr.rel (0) target = $region41
    $region40: #{tpu_custom_call.1} parent=1 // pred_region
      %103 = dma.done [#allocation9], 128
    $region41: #{tpu_custom_call.1} parent=1 // pred_fallthru
      _
    // Predicated region
    $region42: #{tpu_custom_call.1} parent=1 // pred_check
      _
    $region43: #{tpu_custom_call.1} parent=1 // pred_check_branch
      %105 = sbr.rel (0) target = $region45
    $region44: #{tpu_custom_call.1} parent=1 // pred_region
      %107 = dma.done [#allocation9], 7168
    $region45: #{tpu_custom_call.1} parent=1 // pred_fallthru
      _
    // Predicated region
    $region46: #{tpu_custom_call.1} parent=1 // pred_check
      _
    $region47: #{tpu_custom_call.1} parent=1 // pred_check_branch
      %109 = sbr.rel (0) target = $region49
    $region48: #{tpu_custom_call.1} parent=1 // pred_region
      %111 = dma.done [#allocation12], 128
    $region49: #{tpu_custom_call.1} parent=1 // pred_fallthru
      _
    %v112 = vld [vmem:[#allocation10] sm:$0xff]
    %v113 = vld [vmem:[#allocation10 + $0x8] sm:$0xff]
    %v114 = vld [vmem:[#allocation10 + $0x10] sm:$0xff]
    %v115 = vld [vmem:[#allocation10 + $0x18] sm:$0xff]
    %v116 = vld [vmem:[#allocation10 + $0x20] sm:$0xff]
    %v117 = vld [vmem:[#allocation10 + $0x28] sm:$0xff]
    %v118 = vld [vmem:[#allocation10 + $0x30] sm:$0xff]
    %v119 = vld [vmem:[#allocation10 + $0x38] sm:$0xff]
    %v120 = vld [vmem:[#allocation10 + $0x40] sm:$0xff]
    %v121 = vld [vmem:[#allocation10 + $0x48] sm:$0xff]
    %v122 = vld [vmem:[#allocation10 + $0x50] sm:$0xff]
    %v123 = vld [vmem:[#allocation10 + $0x58] sm:$0xff]
    %v124 = vld [vmem:[#allocation10 + $0x60] sm:$0xff]
    %v125 = vld [vmem:[#allocation10 + $0x68] sm:$0xff]
    %v126 = vld [vmem:[#allocation10 + $0x70] sm:$0xff]
    %v127 = vld [vmem:[#allocation10 + $0x78] sm:$0xff]
    %v128 = vld [vmem:[#allocation10 + $0x80] sm:$0xff]
    %v129 = vld [vmem:[#allocation10 + $0x88] sm:$0xff]
    %v130 = vld [vmem:[#allocation10 + $0x90] sm:$0xff]
    %v131 = vld [vmem:[#allocation10 + $0x98] sm:$0xff]
    %v132 = vld [vmem:[#allocation10 + $0xa0] sm:$0xff]
    %v133 = vld [vmem:[#allocation10 + $0xa8] sm:$0xff]
    %v134 = vld [vmem:[#allocation10 + $0xb0] sm:$0xff]
    %v135 = vld [vmem:[#allocation10 + $0xb8] sm:$0xff]
    %v136 = vld [vmem:[#allocation10 + $0xc0] sm:$0xff]
    %v137 = vld [vmem:[#allocation10 + $0xc8] sm:$0xff]
    %v138 = vld [vmem:[#allocation10 + $0xd0] sm:$0xff]
    %v139 = vld [vmem:[#allocation10 + $0xd8] sm:$0xff]
    %v140 = vld [vmem:[#allocation10 + $0xe0] sm:$0xff]
    %v141 = vld [vmem:[#allocation10 + $0xe8] sm:$0xff]
    %v142 = vld [vmem:[#allocation10 + $0xf0] sm:$0xff]
    %v143 = vld [vmem:[#allocation10 + $0xf8] sm:$0xff]
    %v144 = vld [vmem:[#allocation10 + $0x100] sm:$0xff]
    %v145 = vld [vmem:[#allocation10 + $0x108] sm:$0xff]
    %v146 = vld [vmem:[#allocation10 + $0x110] sm:$0xff]
    %v147 = vld [vmem:[#allocation10 + $0x118] sm:$0xff]
    %v148 = vld [vmem:[#allocation10 + $0x120] sm:$0xff]
    %v149 = vld [vmem:[#allocation10 + $0x128] sm:$0xff]
    %v150 = vld [vmem:[#allocation10 + $0x130] sm:$0xff]
    %v151 = vld [vmem:[#allocation10 + $0x138] sm:$0xff]
    %v152 = vld [vmem:[#allocation10 + $0x140] sm:$0xff]
    %v153 = vld [vmem:[#allocation10 + $0x148] sm:$0xff]
    %v154 = vld [vmem:[#allocation10 + $0x150] sm:$0xff]
    %v155 = vld [vmem:[#allocation10 + $0x158] sm:$0xff]
    %v156 = vld [vmem:[#allocation10 + $0x160] sm:$0xff]
    %v157 = vld [vmem:[#allocation10 + $0x168] sm:$0xff]
    %v158 = vld [vmem:[#allocation10 + $0x170] sm:$0xff]
    %v159 = vld [vmem:[#allocation10 + $0x178] sm:$0xff]
    %v160 = vld [vmem:[#allocation10 + $0x180] sm:$0xff]
    %v161 = vld [vmem:[#allocation10 + $0x188] sm:$0xff]
    %v162 = vld [vmem:[#allocation10 + $0x190] sm:$0xff]
    %v163 = vld [vmem:[#allocation10 + $0x198] sm:$0xff]
    %v164 = vld [vmem:[#allocation10 + $0x1a0] sm:$0xff]
    %v165 = vld [vmem:[#allocation10 + $0x1a8] sm:$0xff]
    %v166 = vld [vmem:[#allocation10 + $0x1b0] sm:$0xff]
    %v167 = vld [vmem:[#allocation10 + $0x1b8] sm:$0xff]
    %v168 = vld [vmem:[#allocation11] sm:$0x1f]
    %v169 = vld [vmem:[#allocation2] sm:$0xff]
    %v170 = vld [vmem:[#allocation2 + $0x8] sm:$0xff]
    %v171 = vld [vmem:[#allocation2 + $0x10] sm:$0xff]
    %v172 = vld [vmem:[#allocation2 + $0x18] sm:$0xff]
    %v173 = vld [vmem:[#allocation2 + $0x20] sm:$0xff]
    %v174 = vld [vmem:[#allocation2 + $0x28] sm:$0xff]
    %v175 = vld [vmem:[#allocation2 + $0x30] sm:$0xff]
    %v176 = vld [vmem:[#allocation2 + $0x38] sm:$0xff]
    %v177 = vld [vmem:[#allocation5] sm:$0xff]
    %v178 = vld [vmem:[#allocation5 + $0x8] sm:$0xff]
    %v179 = vld [vmem:[#allocation5 + $0x10] sm:$0xff]
    %v180 = vld [vmem:[#allocation5 + $0x18] sm:$0xff]
    %v181 = vld [vmem:[#allocation5 + $0x20] sm:$0xff]
    %v182 = vld [vmem:[#allocation5 + $0x28] sm:$0xff]
    %v183 = vld [vmem:[#allocation5 + $0x30] sm:$0xff]
    %v184 = vld [vmem:[#allocation5 + $0x38] sm:$0xff]
    %vm185 = vcmask 261120
    %v187 = vsel %vm185, %v177, 0
    %v190 = vsel %vm185, %v178, 0
    %v193 = vsel %vm185, %v179, 0
    %v196 = vsel %vm185, %v180, 0
    %v199 = vsel %vm185, %v181, 0
    %v202 = vsel %vm185, %v182, 0
    %v205 = vsel %vm185, %v183, 0
    %v208 = vsel %vm185, %v184, 0
    %210 = vmatpush.msra.mxu0 0.0
    %211 = vmatpush.msra.mxu0 0.0
    %212 = vmatpush.msra.mxu0 0.0
    %213 = vmatpush.msra.mxu0 0.0
    %214 = vmatpush.msra.mxu0 0.0
    %215 = vmatpush.msra.mxu0 0.0
    %216 = vmatpush.msra.mxu0 0.0
    %217 = vmatpush.msra.mxu0 0.0
    %218 = vmatpush.msra.mxu0 0.0
    %219 = vmatpush.msra.mxu0 0.0
    %220 = vmatpush.msra.mxu0 0.0
    %221 = vmatpush.msra.mxu0 0.0
    %222 = vmatpush.msra.mxu0 %v119
    %223 = vmatpush.msra.mxu0 %v118
    %224 = vmatpush.msra.mxu0 %v117
    %225 = vmatpush.msra.mxu0 %v116
    %226 = vmatmul.f32.gmra.mxu0 %v187
    %v227 = vpop.f32.mrf.mxu0
    %v228 = vadd.f32 0.0, %v227
    %229 = vmatmul.f32.gmra.mxu0 %v190
    %v230 = vpop.f32.mrf.mxu0
    %v231 = vadd.f32 0.0, %v230
    %232 = vmatmul.f32.gmra.mxu0 %v193
    %v233 = vpop.f32.mrf.mxu0
    %v234 = vadd.f32 0.0, %v233
    %235 = vmatmul.f32.gmra.mxu0 %v196
    %v236 = vpop.f32.mrf.mxu0
    %v237 = vadd.f32 0.0, %v236
    %238 = vmatmul.f32.gmra.mxu0 %v199
    %v239 = vpop.f32.mrf.mxu0
    %v240 = vadd.f32 0.0, %v239
    %241 = vmatmul.f32.gmra.mxu0 %v202
    %v242 = vpop.f32.mrf.mxu0
    %v243 = vadd.f32 0.0, %v242
    %244 = vmatmul.f32.gmra.mxu0 %v205
    %v245 = vpop.f32.mrf.mxu0
    %v246 = vadd.f32 0.0, %v245
    %247 = vmatmul.f32.gmra.mxu0 %v208
    %v248 = vpop.f32.mrf.mxu0
    %v249 = vadd.f32 0.0, %v248
    %250 = vdwg.mxu0
    %v252 = vsel %vm185, %v169, 0
    %v255 = vsel %vm185, %v170, 0
    %v258 = vsel %vm185, %v171, 0
    %v261 = vsel %vm185, %v172, 0
    %v264 = vsel %vm185, %v173, 0
    %v267 = vsel %vm185, %v174, 0
    %v270 = vsel %vm185, %v175, 0
    %v273 = vsel %vm185, %v176, 0
    %275 = vmatpush.msra.mxu0 0.0
    %276 = vmatpush.msra.mxu0 0.0
    %277 = vmatpush.msra.mxu0 0.0
    %278 = vmatpush.msra.mxu0 0.0
    %279 = vmatpush.msra.mxu0 0.0
    %280 = vmatpush.msra.mxu0 0.0
    %281 = vmatpush.msra.mxu0 0.0
    %282 = vmatpush.msra.mxu0 0.0
    %283 = vmatpush.msra.mxu0 0.0
    %284 = vmatpush.msra.mxu0 0.0
    %285 = vmatpush.msra.mxu0 0.0
    %286 = vmatpush.msra.mxu0 0.0
    %287 = vmatpush.msra.mxu0 %v115
    %288 = vmatpush.msra.mxu0 %v114
    %289 = vmatpush.msra.mxu0 %v113
    %290 = vmatpush.msra.mxu0 %v112
    %291 = vmatmul.f32.gmra.mxu0 %v252
    %v292 = vpop.f32.mrf.mxu0
    %v293 = vadd.f32 %v228, %v292
    %294 = vmatmul.f32.gmra.mxu0 %v255
    %v295 = vpop.f32.mrf.mxu0
    %v296 = vadd.f32 %v231, %v295
    %297 = vmatmul.f32.gmra.mxu0 %v258
    %v298 = vpop.f32.mrf.mxu0
    %v299 = vadd.f32 %v234, %v298
    %300 = vmatmul.f32.gmra.mxu0 %v261
    %v301 = vpop.f32.mrf.mxu0
    %v302 = vadd.f32 %v237, %v301
    %303 = vmatmul.f32.gmra.mxu0 %v264
    %v304 = vpop.f32.mrf.mxu0
    %v305 = vadd.f32 %v240, %v304
    %306 = vmatmul.f32.gmra.mxu0 %v267
    %v307 = vpop.f32.mrf.mxu0
    %v308 = vadd.f32 %v243, %v307
    %309 = vmatmul.f32.gmra.mxu0 %v270
    %v310 = vpop.f32.mrf.mxu0
    %v311 = vadd.f32 %v246, %v310
    %312 = vmatmul.f32.gmra.mxu0 %v273
    %v313 = vpop.f32.mrf.mxu0
    %v314 = vadd.f32 %v249, %v313
    %315 = vdwg.mxu0
    %v316 = vperm.slane %v168, 0
    %v317 = vadd.f32 %v293, %v316
    %v318 = vadd.f32 %v296, %v316
    %v319 = vadd.f32 %v299, %v316
    %v320 = vadd.f32 %v302, %v316
    %v321 = vadd.f32 %v305, %v316
    %v322 = vadd.f32 %v308, %v316
    %v323 = vadd.f32 %v311, %v316
    %v324 = vadd.f32 %v314, %v316
    %v325 = vmax.f32 %v317, 0.0
    %v326 = vmax.f32 %v318, 0.0
    %v327 = vmax.f32 %v319, 0.0
    %v328 = vmax.f32 %v320, 0.0
    %v329 = vmax.f32 %v321, 0.0
    %v330 = vmax.f32 %v322, 0.0
    %v331 = vmax.f32 %v323, 0.0
    %v332 = vmax.f32 %v324, 0.0
    %v333 = vperm.slane %v168, 1
    %334 = vmatpush.msra.mxu0 %v135
    %335 = vmatpush.msra.mxu0 %v134
    %336 = vmatpush.msra.mxu0 %v133
    %337 = vmatpush.msra.mxu0 %v132
    %338 = vmatpush.msra.mxu0 %v131
    %339 = vmatpush.msra.mxu0 %v130
    %340 = vmatpush.msra.mxu0 %v129
    %341 = vmatpush.msra.mxu0 %v128
    %342 = vmatpush.msra.mxu0 %v127
    %343 = vmatpush.msra.mxu0 %v126
    %344 = vmatpush.msra.mxu0 %v125
    %345 = vmatpush.msra.mxu0 %v124
    %346 = vmatpush.msra.mxu0 %v123
    %347 = vmatpush.msra.mxu0 %v122
    %348 = vmatpush.msra.mxu0 %v121
    %349 = vmatpush.msra.mxu0 %v120
    %350 = vmatmul.f32.gmra.mxu0 %v325
    %v351 = vpop.f32.mrf.mxu0
    %v352 = vadd.f32 %v333, %v351
    %353 = vmatmul.f32.gmra.mxu0 %v326
    %v354 = vpop.f32.mrf.mxu0
    %v355 = vadd.f32 %v333, %v354
    %356 = vmatmul.f32.gmra.mxu0 %v327
    %v357 = vpop.f32.mrf.mxu0
    %v358 = vadd.f32 %v333, %v357
    %359 = vmatmul.f32.gmra.mxu0 %v328
    %v360 = vpop.f32.mrf.mxu0
    %v361 = vadd.f32 %v333, %v360
    %362 = vmatmul.f32.gmra.mxu0 %v329
    %v363 = vpop.f32.mrf.mxu0
    %v364 = vadd.f32 %v333, %v363
    %365 = vmatmul.f32.gmra.mxu0 %v330
    %v366 = vpop.f32.mrf.mxu0
    %v367 = vadd.f32 %v333, %v366
    %368 = vmatmul.f32.gmra.mxu0 %v331
    %v369 = vpop.f32.mrf.mxu0
    %v370 = vadd.f32 %v333, %v369
    %371 = vmatmul.f32.gmra.mxu0 %v332
    %v372 = vpop.f32.mrf.mxu0
    %v373 = vadd.f32 %v333, %v372
    %374 = vdwg.mxu0
    %v375 = vmax.f32 %v352, 0.0
    %v376 = vmax.f32 %v355, 0.0
    %v377 = vmax.f32 %v358, 0.0
    %v378 = vmax.f32 %v361, 0.0
    %v379 = vmax.f32 %v364, 0.0
    %v380 = vmax.f32 %v367, 0.0
    %v381 = vmax.f32 %v370, 0.0
    %v382 = vmax.f32 %v373, 0.0
    %v383 = vld [vmem:[#allocation8] sm:$0xff]
    %384 = vmatpush.msra.mxu0 %v151
    %385 = vmatpush.msra.mxu0 %v150
    %386 = vmatpush.msra.mxu0 %v149
    %387 = vmatpush.msra.mxu0 %v148
    %388 = vmatpush.msra.mxu0 %v147
    %389 = vmatpush.msra.mxu0 %v146
    %390 = vmatpush.msra.mxu0 %v145
    %391 = vmatpush.msra.mxu0 %v144
    %392 = vmatpush.msra.mxu0 %v143
    %393 = vmatpush.msra.mxu0 %v142
    %394 = vmatpush.msra.mxu0 %v141
    %395 = vmatpush.msra.mxu0 %v140
    %396 = vmatpush.msra.mxu0 %v139
    %397 = vmatpush.msra.mxu0 %v138
    %398 = vmatpush.msra.mxu0 %v137
    %399 = vmatpush.msra.mxu0 %v136
    %400 = vmatmul.f32.gmra.mxu0 %v375
    %v401 = vpop.f32.mrf.mxu0
    %v402 = vadd.f32 0.0, %v401
    %403 = vmatmul.f32.gmra.mxu0 %v376
    %v404 = vpop.f32.mrf.mxu0
    %v405 = vadd.f32 0.0, %v404
    %406 = vmatmul.f32.gmra.mxu0 %v377
    %v407 = vpop.f32.mrf.mxu0
    %v408 = vadd.f32 0.0, %v407
    %409 = vmatmul.f32.gmra.mxu0 %v378
    %v410 = vpop.f32.mrf.mxu0
    %v411 = vadd.f32 0.0, %v410
    %412 = vmatmul.f32.gmra.mxu0 %v379
    %v413 = vpop.f32.mrf.mxu0
    %v414 = vadd.f32 0.0, %v413
    %415 = vmatmul.f32.gmra.mxu0 %v380
    %v416 = vpop.f32.mrf.mxu0
    %v417 = vadd.f32 0.0, %v416
    %418 = vmatmul.f32.gmra.mxu0 %v381
    %v419 = vpop.f32.mrf.mxu0
    %v420 = vadd.f32 0.0, %v419
    %421 = vmatmul.f32.gmra.mxu0 %v382
    %v422 = vpop.f32.mrf.mxu0
    %v423 = vadd.f32 0.0, %v422
    %424 = vdwg.mxu0
    %v426 = vrot.slane %v383, 1
    %v427 = vrot.slane %v383, 2
    %v428 = vrot.slane %v383, 3
    %v429 = vrot.slane %v383, 4
    %v430 = vrot.slane %v383, 5
    %v431 = vrot.slane %v383, 6
    %v432 = vrot.slane %v383, 7
    %v433 = vperm.slane %v383, 0
    %v434 = vperm.slane %v426, 0
    %v435 = vperm.slane %v427, 0
    %v436 = vperm.slane %v428, 0
    %v437 = vperm.slane %v429, 0
    %v438 = vperm.slane %v430, 0
    %v439 = vperm.slane %v431, 0
    %v440 = vperm.slane %v432, 0
    %v449 = vadd.f32 %v402, %v433
    %v450 = vadd.f32 %v405, %v434
    %v451 = vadd.f32 %v408, %v435
    %v452 = vadd.f32 %v411, %v436
    %v453 = vadd.f32 %v414, %v437
    %v454 = vadd.f32 %v417, %v438
    %v455 = vadd.f32 %v420, %v439
    %v456 = vadd.f32 %v423, %v440
    %v457 = vmax.f32 %v449, 0.0
    %v458 = vmax.f32 %v450, 0.0
    %v459 = vmax.f32 %v451, 0.0
    %v460 = vmax.f32 %v452, 0.0
    %v461 = vmax.f32 %v453, 0.0
    %v462 = vmax.f32 %v454, 0.0
    %v463 = vmax.f32 %v455, 0.0
    %v464 = vmax.f32 %v456, 0.0
    %v465 = vperm.slane %v168, 2
    %466 = vmatpush.msra.mxu0 %v167
    %467 = vmatpush.msra.mxu0 %v166
    %468 = vmatpush.msra.mxu0 %v165
    %469 = vmatpush.msra.mxu0 %v164
    %470 = vmatpush.msra.mxu0 %v163
    %471 = vmatpush.msra.mxu0 %v162
    %472 = vmatpush.msra.mxu0 %v161
    %473 = vmatpush.msra.mxu0 %v160
    %474 = vmatpush.msra.mxu0 %v159
    %475 = vmatpush.msra.mxu0 %v158
    %476 = vmatpush.msra.mxu0 %v157
    %477 = vmatpush.msra.mxu0 %v156
    %478 = vmatpush.msra.mxu0 %v155
    %479 = vmatpush.msra.mxu0 %v154
    %480 = vmatpush.msra.mxu0 %v153
    %481 = vmatpush.msra.mxu0 %v152
    %482 = vmatmul.f32.gmra.mxu0 %v457
    %v483 = vpop.f32.mrf.mxu0
    %v484 = vadd.f32 %v465, %v483
    %485 = vmatmul.f32.gmra.mxu0 %v458
    %v486 = vpop.f32.mrf.mxu0
    %v487 = vadd.f32 %v465, %v486
    %488 = vmatmul.f32.gmra.mxu0 %v459
    %v489 = vpop.f32.mrf.mxu0
    %v490 = vadd.f32 %v465, %v489
    %491 = vmatmul.f32.gmra.mxu0 %v460
    %v492 = vpop.f32.mrf.mxu0
    %v493 = vadd.f32 %v465, %v492
    %494 = vmatmul.f32.gmra.mxu0 %v461
    %v495 = vpop.f32.mrf.mxu0
    %v496 = vadd.f32 %v465, %v495
    %497 = vmatmul.f32.gmra.mxu0 %v462
    %v498 = vpop.f32.mrf.mxu0
    %v499 = vadd.f32 %v465, %v498
    %500 = vmatmul.f32.gmra.mxu0 %v463
    %v501 = vpop.f32.mrf.mxu0
    %v502 = vadd.f32 %v465, %v501
    %503 = vmatmul.f32.gmra.mxu0 %v464
    %v504 = vpop.f32.mrf.mxu0
    %v505 = vadd.f32 %v465, %v504
    %506 = vdwg.mxu0
    %v507 = vmax.f32 %v484, 0.0
    %v508 = vmax.f32 %v487, 0.0
    %v509 = vmax.f32 %v490, 0.0
    %v510 = vmax.f32 %v493, 0.0
    %v511 = vmax.f32 %v496, 0.0
    %v512 = vmax.f32 %v499, 0.0
    %v513 = vmax.f32 %v502, 0.0
    %v514 = vmax.f32 %v505, 0.0
    %v515 = vperm.slane %v168, 3
    %v516 = vmul.f32 %v507, %v515
    %v517 = vmul.f32 %v508, %v515
    %v518 = vmul.f32 %v509, %v515
    %v519 = vmul.f32 %v510, %v515
    %v520 = vmul.f32 %v511, %v515
    %v521 = vmul.f32 %v512, %v515
    %v522 = vmul.f32 %v513, %v515
    %v523 = vmul.f32 %v514, %v515
    %524 = vadd.xlane.f32.xlu0 %v516
    %v525 = vpop.xlane.xlu0 %524
    %526 = vadd.xlane.f32.xlu0 %v517
    %v527 = vpop.xlane.xlu0 %526
    %528 = vadd.xlane.f32.xlu0 %v518
    %v529 = vpop.xlane.xlu0 %528
    %530 = vadd.xlane.f32.xlu0 %v519
    %v531 = vpop.xlane.xlu0 %530
    %532 = vadd.xlane.f32.xlu0 %v520
    %v533 = vpop.xlane.xlu0 %532
    %534 = vadd.xlane.f32.xlu0 %v521
    %v535 = vpop.xlane.xlu0 %534
    %536 = vadd.xlane.f32.xlu0 %v522
    %v537 = vpop.xlane.xlu0 %536
    %538 = vadd.xlane.f32.xlu0 %v523
    %v539 = vpop.xlane.xlu0 %538
    %v541 = vrot.slane %v168, 4
    %s542 = vtos %v541
    %v543 = vstv %s542
    %v545 = vadd.f32 %v525, %v543
    %v546 = vadd.f32 %v527, %v543
    %v547 = vadd.f32 %v529, %v543
    %v548 = vadd.f32 %v531, %v543
    %v549 = vadd.f32 %v533, %v543
    %v550 = vadd.f32 %v535, %v543
    %v551 = vadd.f32 %v537, %v543
    %v552 = vadd.f32 %v539, %v543
    %v553 = vld [vmem:[#allocation7] sm:$0xff]
    %vm554 = vcmp.gt.f32.partialorder %v553, 0.0
    %v563 = vlaneseq
    %v564 = vand.u32 %v563, 127
    %v565 = vperm.slane %v545, %v564
    %v566 = vperm.slane %v546, %v564
    %v567 = vperm.slane %v547, %v564
    %v568 = vperm.slane %v548, %v564
    %v569 = vperm.slane %v549, %v564
    %v570 = vperm.slane %v550, %v564
    %v571 = vperm.slane %v551, %v564
    %v572 = vperm.slane %v552, %v564
    %vm573 = vcmask 1041409
    %v574 = vsel %vm573, %v566, %v565
    %vm575 = vcmask 1042434
    %v576 = vsel %vm575, %v567, %v574
    %vm577 = vcmask 1043459
    %v578 = vsel %vm577, %v568, %v576
    %vm579 = vcmask 1044484
    %v580 = vsel %vm579, %v569, %v578
    %vm581 = vcmask 1045509
    %v582 = vsel %vm581, %v570, %v580
    %vm583 = vcmask 1046534
    %v584 = vsel %vm583, %v571, %v582
    %vm585 = vcmask 1047559
    %v586 = vsel %vm585, %v572, %v584
    %v588 = vsel %vm554, %v586, -1e+09
    %vm589 = vcmask 64512
    %v590 = vsel %vm589, %v588, -inf
    %591 = vmax.xlane.f32.xlu0 %v590
    %v592 = vpop.xlane.xlu0 %591
    %v593 = vsub.f32 %v588, %v592
    %v594 = vmul.f32 %v593, 1.442695
    %v595 = vpow.pop %v594
    %v596 = vsel %vm589, %v595, 0.0
    %597 = vadd.xlane.f32.xlu0 %v596
    %v598 = vpop.xlane.xlu0 %597
    %v599 = vrcp.pop %v598
    %v600 = vmul.f32 %v598, %v599
    %v601 = vsub.f32 1.0, %v600
    %v602 = vmul.f32 %v599, %v601
    %v603 = vadd.f32 %v599, %v602
    %vm604 = vweird.f32 %v598
    %vm605 = vweird.f32 %v599
    %vm606 = vmor %vm604, %vm605
    %v607 = vsel %vm606, %v599, %v603
    %v608 = vand.u32 2147483647, %v598
    %vm609 = vcmp.eq.f32.partialorder %v608, 8.507059e+37
    %v610 = vand.u32 %v598, 2147483648
    %v611 = vor.u32 1.1754944e-38, %v610
    %v612 = vsel %vm609, %v611, %v607
    %v613 = vmul.f32 %v595, %v612
    %v614 = vperm.slane %v613, 0
    %v615 = vlaneseq
    %v616 = vshrl.u32 %v615, 7
    %618 = vset.pattern.permute.xlu0 %v616
    %619 = vperm.xlu0 %618, %v614
    %v620 = vpop.permute.xlu0 %619
    %v621 = vperm.slane %v613, 1
    %v622 = vlaneseq
    %v623 = vshrl.u32 %v622, 7
    %625 = vset.pattern.permute.xlu0 %v623
    %626 = vperm.xlu0 %625, %v621
    %v627 = vpop.permute.xlu0 %626
    %v628 = vperm.slane %v613, 2
    %v629 = vlaneseq
    %v630 = vshrl.u32 %v629, 7
    %632 = vset.pattern.permute.xlu0 %v630
    %633 = vperm.xlu0 %632, %v628
    %v634 = vpop.permute.xlu0 %633
    %v635 = vperm.slane %v613, 3
    %v636 = vlaneseq
    %v637 = vshrl.u32 %v636, 7
    %639 = vset.pattern.permute.xlu0 %v637
    %640 = vperm.xlu0 %639, %v635
    %v641 = vpop.permute.xlu0 %640
    %v642 = vperm.slane %v613, 4
    %v643 = vlaneseq
    %v644 = vshrl.u32 %v643, 7
    %646 = vset.pattern.permute.xlu0 %v644
    %647 = vperm.xlu0 %646, %v642
    %v648 = vpop.permute.xlu0 %647
    %v649 = vperm.slane %v613, 5
    %v650 = vlaneseq
    %v651 = vshrl.u32 %v650, 7
    %653 = vset.pattern.permute.xlu0 %v651
    %654 = vperm.xlu0 %653, %v649
    %v655 = vpop.permute.xlu0 %654
    %v656 = vperm.slane %v613, 6
    %v657 = vlaneseq
    %v658 = vshrl.u32 %v657, 7
    %660 = vset.pattern.permute.xlu0 %v658
    %661 = vperm.xlu0 %660, %v656
    %v662 = vpop.permute.xlu0 %661
    %v663 = vperm.slane %v613, 7
    %v664 = vlaneseq
    %v665 = vshrl.u32 %v664, 7
    %667 = vset.pattern.permute.xlu0 %v665
    %668 = vperm.xlu0 %667, %v663
    %v669 = vpop.permute.xlu0 %668
    %v670 = vmul.f32 %v375, %v620
    %v671 = vmul.f32 %v376, %v627
    %v672 = vmul.f32 %v377, %v634
    %v673 = vmul.f32 %v378, %v641
    %v674 = vmul.f32 %v379, %v648
    %v675 = vmul.f32 %v380, %v655
    %v676 = vmul.f32 %v381, %v662
    %v677 = vmul.f32 %v382, %v669
    %v678 = vrot.slane %v670, 4
    %v679 = vadd.f32 %v670, %v678
    %v680 = vrot.slane %v679, 2
    %v681 = vadd.f32 %v679, %v680
    %v682 = vrot.slane %v681, 1
    %v683 = vadd.f32 %v681, %v682
    %v684 = vrot.slane %v671, 4
    %v685 = vadd.f32 %v671, %v684
    %v686 = vrot.slane %v685, 2
    %v687 = vadd.f32 %v685, %v686
    %v688 = vrot.slane %v687, 1
    %v689 = vadd.f32 %v687, %v688
    %v690 = vrot.slane %v672, 4
    %v691 = vadd.f32 %v672, %v690
    %v692 = vrot.slane %v691, 2
    %v693 = vadd.f32 %v691, %v692
    %v694 = vrot.slane %v693, 1
    %v695 = vadd.f32 %v693, %v694
    %v696 = vrot.slane %v673, 4
    %v697 = vadd.f32 %v673, %v696
    %v698 = vrot.slane %v697, 2
    %v699 = vadd.f32 %v697, %v698
    %v700 = vrot.slane %v699, 1
    %v701 = vadd.f32 %v699, %v700
    %v702 = vrot.slane %v674, 4
    %v703 = vadd.f32 %v674, %v702
    %v704 = vrot.slane %v703, 2
    %v705 = vadd.f32 %v703, %v704
    %v706 = vrot.slane %v705, 1
    %v707 = vadd.f32 %v705, %v706
    %v708 = vrot.slane %v675, 4
    %v709 = vadd.f32 %v675, %v708
    %v710 = vrot.slane %v709, 2
    %v711 = vadd.f32 %v709, %v710
    %v712 = vrot.slane %v711, 1
    %v713 = vadd.f32 %v711, %v712
    %v714 = vrot.slane %v676, 4
    %v715 = vadd.f32 %v676, %v714
    %v716 = vrot.slane %v715, 2
    %v717 = vadd.f32 %v715, %v716
    %v718 = vrot.slane %v717, 1
    %v719 = vadd.f32 %v717, %v718
    %v720 = vrot.slane %v677, 4
    %v721 = vadd.f32 %v677, %v720
    %v722 = vrot.slane %v721, 2
    %v723 = vadd.f32 %v721, %v722
    %v724 = vrot.slane %v723, 1
    %v725 = vadd.f32 %v723, %v724
    %v734 = vsel %vm573, %v689, %v683
    %v735 = vsel %vm575, %v695, %v734
    %v736 = vsel %vm577, %v701, %v735
    %v737 = vsel %vm579, %v707, %v736
    %v738 = vsel %vm581, %v713, %v737
    %v739 = vsel %vm583, %v719, %v738
    %v740 = vsel %vm585, %v725, %v739
    %742 = vst [vmem:[#allocation13] sm:$0xff] %v740
    // Predicated region
    $region50: #{tpu_custom_call.1} parent=1 // pred_check
      _
    $region51: #{tpu_custom_call.1} parent=1 // pred_check_branch
      %744 = sbr.rel (0) target = $region53
    $region52: #{tpu_custom_call.1} parent=1 // pred_region
      %746 = vsyncadd [#allocation4], 0
      %s748 = sshll.u32 [#allocation13], 4
      %s749 = int_to_ptr.vmem [resolvable:$true] %s748
      %s750 = sshll.u32 %s6, 4
      %s751 = int_to_ptr.hbm [resolvable:$true] %s750
      %753 = dma.vmem_to_hbm [thread:$0]  %s749, 128, %s751, [#allocation4]
    $region53: #{tpu_custom_call.1} parent=1 // pred_fallthru
      _
    // Predicated region
    $region54: #{tpu_custom_call.1} parent=1 // pred_check
      _
    $region55: #{tpu_custom_call.1} parent=1 // pred_check_branch
      %755 = sbr.rel (0) target = $region57
    $region56: #{tpu_custom_call.1} parent=1 // pred_region
      %757 = dma.done [#allocation4], 128
    $region57: #{tpu_custom_call.1} parent=1 // pred_fallthru
      _
    %758 = vsyncpa [#allocation3], 1
    %759 = vsyncpa [#allocation6], 1
    %760 = vsyncpa [#allocation9], 1
    %761 = vsyncpa [#allocation12], 1
    %762 = vsyncpa [#allocation4], 1

</llo_original>
